<compile_context>
chip_gen: v7x
topology: tpu7x:2x2x1
jax: 0.10.0
libtpu: 0.0.40
codegen_flags: <defaults>
</compile_context>

<pallas_src>
import functools
import math

import jax
import jax.numpy as jnp
from jax.experimental import pallas as pl
from jax.experimental.pallas import tpu as pltpu

_INV_SQRT2 = 0.7071067811865476  # 1/sqrt(2), hoisted as a Python constant


def ffn_kernel(x_ref, w1_ref, b1_ref, w2_ref, b2_ref, o_ref, acc_ref):
    """One (row-tile, expansion-tile) step of the FFN.

    x_ref:   [tm, H]       activation row tile (resident across the N axis)
    w1_ref:  [H, tn]       slice of first weight (pre-transposed)
    b1_ref:  [1, tn]       slice of first bias
    w2_ref:  [tn, H]       slice of second weight (pre-transposed)
    b2_ref:  [1, H]        second bias (full, fetched once)
    o_ref:   [tm, H]       output row tile (resident across the N axis)
    acc_ref: [tm, H] f32   VMEM accumulator
    """
    n = pl.program_id(1)

    @pl.when(n == 0)
    def _init():
        # Seed the accumulator with the second bias (broadcast over rows) so the
        # epilogue is just a cast+store.
        acc_ref[...] = jnp.broadcast_to(
            b2_ref[...].astype(jnp.float32), acc_ref.shape)

    # First matmul slice on the MXU (f32 accumulation), + bias.
    h = jnp.dot(x_ref[...], w1_ref[...], preferred_element_type=jnp.float32)
    h = h + b1_ref[...].astype(jnp.float32)

    # Exact (erf-based) GELU -- matches torch.nn.GELU() default.
    h = 0.5 * h * (1.0 + jax.lax.erf(h * _INV_SQRT2))

    # Second matmul slice; partial products accumulate over the 4H axis.
    acc_ref[...] += jnp.dot(h.astype(w2_ref.dtype), w2_ref[...],
                            preferred_element_type=jnp.float32)

    @pl.when(n == pl.num_programs(1) - 1)
    def _finalize():
        o_ref[...] = acc_ref[...].astype(o_ref.dtype)


def _round_up(a, b):
    return (a + b - 1) // b * b


def _pick_tn(n4, tile_n, per_tn_bytes, fixed_bytes, budget_bytes):
    """Largest lane-aligned divisor of 4H (<= tile_n) whose VMEM footprint fits."""
    best = None
    top = (min(tile_n, n4) // 128) * 128
    for c in range(top, 0, -128):
        if n4 % c != 0:
            continue
        if best is None:
            best = c
        if fixed_bytes + per_tn_bytes * c <= budget_bytes:
            return c
    return best if best is not None else n4


@functools.partial(jax.jit, static_argnames=("tile_m", "tile_n"))
def ffn_forward(x, w1, b1, w2, b2, *, tile_m=128, tile_n=512):
    """x: [batch, seq, n_hidden] -> [batch, seq, n_hidden]."""
    batch, seq, n_hidden = x.shape
    n_hidden4 = w1.shape[1]
    assert w1.shape == (n_hidden, n_hidden4)
    assert w2.shape == (n_hidden4, n_hidden)

    M = batch * seq

    # Row tile: use tile_m when there are enough rows, otherwise one 8-aligned
    # tile covering everything (small / demo shapes).  Pad M to a tile multiple.
    tm = tile_m if M >= tile_m else _round_up(M, 8)
    Mp = _round_up(M, tm)

    isz = jnp.dtype(x.dtype).itemsize
    # Per-step VMEM footprint: double-buffered pipeline blocks + f32 accumulator.
    fixed = (2 * (tm * n_hidden * isz          # x row tile
                  + n_hidden * isz             # b2
                  + tm * n_hidden * isz)       # out tile
             + tm * n_hidden * 4)              # accumulator (f32)
    per_tn = 2 * (n_hidden * isz               # W1 column slice
                  + isz                        # b1 slice
                  + n_hidden * isz)            # W2 row slice
    budget = 40 * 1024 * 1024                  # leaves headroom on v7x (64 MiB VMEM)
    tn = _pick_tn(n_hidden4, tile_n, per_tn, fixed, budget)

    est = fixed + per_tn * tn
    vmem_limit = None
    if est > 28 * 1024 * 1024:                 # only raise the scoped limit if needed
        vmem_limit = min(int(est * 1.25), 56 * 1024 * 1024)

    x2d = x.reshape(M, n_hidden)
    if Mp != M:
        x2d = jnp.pad(x2d, ((0, Mp - M), (0, 0)))
    b1_2d = b1.reshape(1, n_hidden4)
    b2_2d = b2.reshape(1, n_hidden)

    grid = (Mp // tm, n_hidden4 // tn)

    weight_bytes = (w1.size + w2.size) * jnp.dtype(w1.dtype).itemsize
    cost = pl.CostEstimate(
        flops=int(4 * Mp * n_hidden * n_hidden4),
        transcendentals=int(Mp * n_hidden4),
        bytes_accessed=int(2 * Mp * n_hidden * isz + weight_bytes * (Mp // tm)),
    )

    out2d = pl.pallas_call(
        ffn_kernel,
        out_shape=jax.ShapeDtypeStruct((Mp, n_hidden), x.dtype),
        grid_spec=pltpu.PrefetchScalarGridSpec(
            num_scalar_prefetch=0,
            grid=grid,
            in_specs=[
                pl.BlockSpec((tm, n_hidden), lambda i, n: (i, 0)),   # x rows (resident over n)
                pl.BlockSpec((n_hidden, tn), lambda i, n: (0, n)),   # W1 slice
                pl.BlockSpec((1, tn), lambda i, n: (0, n)),          # b1 slice
                pl.BlockSpec((tn, n_hidden), lambda i, n: (n, 0)),   # W2 slice
                pl.BlockSpec((1, n_hidden), lambda i, n: (0, 0)),    # b2 (fetched once)
            ],
            out_specs=pl.BlockSpec((tm, n_hidden), lambda i, n: (i, 0)),
            scratch_shapes=[pltpu.VMEM((tm, n_hidden), jnp.float32)],
        ),
        compiler_params=pltpu.CompilerParams(
            dimension_semantics=("parallel", "arbitrary"),
            vmem_limit_bytes=vmem_limit,
        ),
        cost_estimate=cost,
    )(x2d, w1, b1_2d, w2, b2_2d)

    if Mp != M:
        out2d = out2d[:M]
    return out2d.reshape(batch, seq, n_hidden)


def init_params(key, n_hidden, dtype=jnp.float32):
    """Deterministic init mimicking nn.Linear default (U[-1/sqrt(fan_in), +])."""
    n_hidden4 = 4 * n_hidden
    k1, k2, k3, k4 = jax.random.split(key, 4)
    bound1 = 1.0 / math.sqrt(n_hidden)
    bound2 = 1.0 / math.sqrt(n_hidden4)
    # stored already transposed relative to PyTorch's [out, in] convention
    w1 = jax.random.uniform(k1, (n_hidden, n_hidden4), dtype, -bound1, bound1)
    b1 = jax.random.uniform(k2, (n_hidden4,), dtype, -bound1, bound1)
    w2 = jax.random.uniform(k3, (n_hidden4, n_hidden), dtype, -bound2, bound2)
    b2 = jax.random.uniform(k4, (n_hidden,), dtype, -bound2, bound2)
    return w1, b1, w2, b2


def ffn_reference(x, w1, b1, w2, b2):
    """Plain-JAX reference matching the PyTorch module."""
    b, s, h_dim = x.shape
    h = x.reshape(b * s, h_dim) @ w1 + b1
    h = 0.5 * h * (1.0 + jax.lax.erf(h * _INV_SQRT2))
    return (h @ w2 + b2).reshape(b, s, h_dim)


if __name__ == "__main__":
    batch, seq, n_hidden = 2, 8, 128  # small [B, S, H] consistent with the module

    key = jax.random.PRNGKey(0)
    kx, kp = jax.random.split(key)
    x = jax.random.normal(kx, (batch, seq, n_hidden), jnp.float32)
    w1, b1, w2, b2 = init_params(kp, n_hidden)

    # (a) production-style tiles (collapses to a single grid step at toy shapes)
    out_a = jax.block_until_ready(ffn_forward(x, w1, b1, w2, b2))
    # (b) small tiles to exercise the M-parallel axis and 4H accumulation loop
    out_b = jax.block_until_ready(
        ffn_forward(x, w1, b1, w2, b2, tile_m=8, tile_n=128))

    ref = ffn_reference(x, w1, b1, w2, b2)
    assert jnp.allclose(out_a, ref, atol=1e-4, rtol=1e-4), "mismatch (default tiles)"
    assert jnp.allclose(out_b, ref, atol=1e-4, rtol=1e-4), "mismatch (small tiles)"

    print("KERNEL_OK")
</pallas_src>

<mosaic_0001>
module attributes {stable_mosaic.version = 11 : i64} {
  func.func @ffn_kernel(%arg0: i32, %arg1: i32, %arg2: memref<16x128xf32, #tpu.memory_space<vmem>>, %arg3: memref<128x512xf32, #tpu.memory_space<vmem>>, %arg4: memref<1x512xf32, #tpu.memory_space<vmem>>, %arg5: memref<512x128xf32, #tpu.memory_space<vmem>>, %arg6: memref<1x128xf32, #tpu.memory_space<vmem>>, %arg7: memref<16x128xf32, #tpu.memory_space<vmem>>, %arg8: memref<16x128xf32, #tpu.memory_space<vmem>>) attributes {dimension_semantics = [#tpu.dimension_semantics<parallel>, #tpu.dimension_semantics<arbitrary>], iteration_bounds = array<i64: 1, 1>, scalar_prefetch = 0 : i64, scratch_operands = 1 : i64, tpu.core_type = #tpu.core_type<tc>, window_params = [{transform_indices = @transform_0, window_bounds = array<i64: 16, 128>}, {transform_indices = @transform_1, window_bounds = array<i64: 128, 512>}, {transform_indices = @transform_2, window_bounds = array<i64: 1, 512>}, {transform_indices = @transform_3, window_bounds = array<i64: 512, 128>}, {pipeline_mode = #tpu.pipeline_mode<synchronous>, transform_indices = @transform_4, window_bounds = array<i64: 1, 128>}, {transform_indices = @transform_5, window_bounds = array<i64: 16, 128>}]} {
    %c0_i32 = arith.constant 0 : i32
    %0 = arith.cmpi eq, %arg1, %c0_i32 : i32
    %1 = arith.extui %0 : i1 to i32
    %c0_i32_0 = arith.constant 0 : i32
    %2 = arith.cmpi ne, %1, %c0_i32_0 : i32
    scf.if %2 {
      %c0_18 = arith.constant 0 : index
      %c0_19 = arith.constant 0 : index
      %25 = vector.load %arg6[%c0_18, %c0_19] : memref<1x128xf32, #tpu.memory_space<vmem>>, vector<1x128xf32>
      %26 = vector.shape_cast %25 : vector<1x128xf32> to vector<1x128xf32>
      %27 = vector.broadcast %26 : vector<1x128xf32> to vector<16x128xf32>
      %c0_20 = arith.constant 0 : index
      %c0_21 = arith.constant 0 : index
      %28 = vector.load %arg8[%c0_20, %c0_21] : memref<16x128xf32, #tpu.memory_space<vmem>>, vector<16x128xf32>
      tpu.vector_store %arg8[%c0_20, %c0_21], %27 {strides = array<i32>} : memref<16x128xf32, #tpu.memory_space<vmem>>, vector<16x128xf32>,
    } else {
    }
    %c0 = arith.constant 0 : index
    %c0_1 = arith.constant 0 : index
    %3 = vector.load %arg2[%c0, %c0_1] : memref<16x128xf32, #tpu.memory_space<vmem>>, vector<16x128xf32>
    %c0_2 = arith.constant 0 : index
    %c0_3 = arith.constant 0 : index
    %4 = vector.load %arg3[%c0_2, %c0_3] : memref<128x512xf32, #tpu.memory_space<vmem>>, vector<128x512xf32>
    %cst = arith.constant dense<0.000000e+00> : vector<16x512xf32>
    %5 = tpu.matmul %3, %4, %cst {dimension_numbers = #tpu.dot_dimension_numbers<[1], [0], [0], [1], [0, 0, 1, 1], [], []>} : vector<16x128xf32>, vector<128x512xf32>, vector<16x512xf32> -> vector<16x512xf32>
    %c0_4 = arith.constant 0 : index
    %c0_5 = arith.constant 0 : index
    %6 = vector.load %arg4[%c0_4, %c0_5] : memref<1x512xf32, #tpu.memory_space<vmem>>, vector<1x512xf32>
    %7 = vector.broadcast %6 : vector<1x512xf32> to vector<16x512xf32>
    %8 = arith.addf %5, %7 : vector<16x512xf32>
    %cst_6 = arith.constant 5.000000e-01 : f32
    %9 = vector.broadcast %cst_6 : f32 to vector<16x512xf32>
    %10 = arith.mulf %9, %8 : vector<16x512xf32>
    %cst_7 = arith.constant 0.707106769 : f32
    %11 = vector.broadcast %cst_7 : f32 to vector<16x512xf32>
    %12 = arith.mulf %8, %11 : vector<16x512xf32>
    %13 = math.erf %12 : vector<16x512xf32>
    %cst_8 = arith.constant 1.000000e+00 : f32
    %14 = vector.broadcast %cst_8 : f32 to vector<16x512xf32>
    %15 = arith.addf %14, %13 : vector<16x512xf32>
    %16 = arith.mulf %10, %15 : vector<16x512xf32>
    %c0_9 = arith.constant 0 : index
    %c0_10 = arith.constant 0 : index
    %17 = vector.load %arg8[%c0_9, %c0_10] : memref<16x128xf32, #tpu.memory_space<vmem>>, vector<16x128xf32>
    %c0_11 = arith.constant 0 : index
    %c0_12 = arith.constant 0 : index
    %18 = vector.load %arg5[%c0_11, %c0_12] : memref<512x128xf32, #tpu.memory_space<vmem>>, vector<512x128xf32>
    %cst_13 = arith.constant dense<0.000000e+00> : vector<16x128xf32>
    %19 = tpu.matmul %16, %18, %cst_13 {dimension_numbers = #tpu.dot_dimension_numbers<[1], [0], [0], [1], [0, 0, 1, 1], [], []>} : vector<16x512xf32>, vector<512x128xf32>, vector<16x128xf32> -> vector<16x128xf32>
    %20 = arith.addf %17, %19 : vector<16x128xf32>
    %c0_14 = arith.constant 0 : index
    %c0_15 = arith.constant 0 : index
    %21 = vector.load %arg8[%c0_14, %c0_15] : memref<16x128xf32, #tpu.memory_space<vmem>>, vector<16x128xf32>
    tpu.vector_store %arg8[%c0_14, %c0_15], %20 {strides = array<i32>} : memref<16x128xf32, #tpu.memory_space<vmem>>, vector<16x128xf32>,
    %c0_i32_16 = arith.constant 0 : i32
    %22 = arith.cmpi eq, %arg1, %c0_i32_16 : i32
    %23 = arith.extui %22 : i1 to i32
    %c0_i32_17 = arith.constant 0 : i32
    %24 = arith.cmpi ne, %23, %c0_i32_17 : i32
    scf.if %24 {
      %c0_18 = arith.constant 0 : index
      %c0_19 = arith.constant 0 : index
      %25 = vector.load %arg8[%c0_18, %c0_19] : memref<16x128xf32, #tpu.memory_space<vmem>>, vector<16x128xf32>
      %c0_20 = arith.constant 0 : index
      %c0_21 = arith.constant 0 : index
      %26 = vector.load %arg7[%c0_20, %c0_21] : memref<16x128xf32, #tpu.memory_space<vmem>>, vector<16x128xf32>
      tpu.vector_store %arg7[%c0_20, %c0_21], %25 {strides = array<i32>} : memref<16x128xf32, #tpu.memory_space<vmem>>, vector<16x128xf32>,
    } else {
    }
    return
  }
  func.func @transform_0(%arg0: i32, %arg1: i32) -> (i32, i32) {
    %c0_i32 = arith.constant 0 : i32
    %c0_i32_0 = arith.constant 0 : i32
    return %arg0, %c0_i32 : i32, i32
  }
  func.func @transform_1(%arg0: i32, %arg1: i32) -> (i32, i32) {
    %c0_i32 = arith.constant 0 : i32
    %c0_i32_0 = arith.constant 0 : i32
    return %c0_i32, %arg1 : i32, i32
  }
  func.func @transform_2(%arg0: i32, %arg1: i32) -> (i32, i32) {
    %c0_i32 = arith.constant 0 : i32
    %c0_i32_0 = arith.constant 0 : i32
    return %c0_i32, %arg1 : i32, i32
  }
  func.func @transform_3(%arg0: i32, %arg1: i32) -> (i32, i32) {
    %c0_i32 = arith.constant 0 : i32
    %c0_i32_0 = arith.constant 0 : i32
    return %arg1, %c0_i32 : i32, i32
  }
  func.func @transform_4(%arg0: i32, %arg1: i32) -> (i32, i32) {
    %c0_i32 = arith.constant 0 : i32
    %c0_i32_0 = arith.constant 0 : i32
    %c0_i32_1 = arith.constant 0 : i32
    return %c0_i32, %c0_i32_0 : i32, i32
  }
  func.func @transform_5(%arg0: i32, %arg1: i32) -> (i32, i32) {
    %c0_i32 = arith.constant 0 : i32
    %c0_i32_0 = arith.constant 0 : i32
    return %arg0, %c0_i32 : i32, i32
  }
}

</mosaic_0001>

<llo_original>
// kernel: ffn_forward.1
$region0: #{ffn_forward.1}
  #allocation0 [shape = 'u32[]', space=smem, size = 0x4, offset = 0x4, fixed_abs, tag = 'smem constant byte address 0x4 - core index']
  #allocation1 [shape = 'u32[144,128]{1,0:T(1,128)}', space=vmem, size = 0x12000, scoped, tag = 'internal scratch']
  #allocation2 [shape = 'f32[16,128]{1,0:T(8,128)}', space=vmem, size = 0x2000, scoped, tag = 'scratch operand']
  %s0 = inlined_call_operand.hbm [shape: f32[16,128], index: 0, kind: input, shape index: {}]
  %s1 = inlined_call_operand.hbm [shape: f32[128,512], index: 1, kind: input, shape index: {}]
  %s2 = inlined_call_operand.vmem [shape: f32[1,512], index: 2, kind: input, shape index: {}]
  %s3 = inlined_call_operand.hbm [shape: f32[512,128], index: 3, kind: input, shape index: {}]
  %s4 = inlined_call_operand.vmem [shape: f32[1,128], index: 4, kind: input, shape index: {}]
  %s5 = inlined_call_operand.hbm [shape: f32[16,128], index: 5, kind: output, shape index: {}]
  %s6 = sld [smem:[#allocation0]]
  $region50: #{ffn_forward.1} parent=0
    _
  %s8 = ssub.s32 1, %s6
  %s9 = scalar_select 0, %s8, %s6
  $region1: #{ffn_forward.1} parent=0
    #allocation3 [shape = 'u8[8192]{0}', space=vmem, size = 0x2000, scoped, tag = 'input window, operand 0, single buffered']
    #allocation4 [shape = 's32[1]{0}', space=sflag, size = 0x4, scoped, tag = 'scoped memory for ffn_forward.1']
    #allocation5 [shape = 's32[1]{0}', space=sflag, size = 0x4, scoped, tag = 'scoped memory for ffn_forward.1']
    #allocation6 [shape = 'u8[262144]{0}', space=vmem, size = 0x40000, scoped, tag = 'input window, operand 1, single buffered']
    #allocation7 [shape = 's32[1]{0}', space=sflag, size = 0x4, scoped, tag = 'scoped memory for ffn_forward.1']
    #allocation8 [shape = 'u8[262144]{0}', space=vmem, size = 0x40000, scoped, tag = 'input window, operand 3, single buffered']
    #allocation9 [shape = 'u8[8192]{0}', space=vmem, size = 0x2000, scoped, tag = 'output window, operand 0, single buffered']
    %10 = vsyncpa [#allocation4], 0
    %11 = vsyncpa [#allocation7], 0
    %12 = vsyncpa [#allocation5], 0
    // Predicated region
    $region2: #{ffn_forward.1} parent=1 // pred_check
      _
    $region3: #{ffn_forward.1} parent=1 // pred_check_branch
      %14 = sbr.rel (0) target = $region5
    $region4: #{ffn_forward.1} parent=1 // pred_region
      %s16 = ssub.s32 256, 256
      %17 = vsyncadd [#allocation4], %s16
      %s18 = sshll.u32 [#allocation3], 4
      %s19 = int_to_ptr.vmem [resolvable:$true] %s18
      %24 = dma.hbm_to_vmem [thread:$0]  %s0, 256, %s19, [#allocation4], 128, 128, 8
    $region5: #{ffn_forward.1} parent=1 // pred_fallthru
      _
    // Predicated region
    $region6: #{ffn_forward.1} parent=1 // pred_check
      _
    $region7: #{ffn_forward.1} parent=1 // pred_check_branch
      %26 = sbr.rel (0) target = $region9
    $region8: #{ffn_forward.1} parent=1 // pred_region
      %s28 = ssub.s32 8192, 8192
      %29 = vsyncadd [#allocation7], %s28
      %s30 = sshll.u32 [#allocation6], 4
      %s31 = int_to_ptr.vmem [resolvable:$true] %s30
      %36 = dma.hbm_to_vmem [thread:$0]  %s1, 8192, %s31, [#allocation7], 512, 512, 32
    $region9: #{ffn_forward.1} parent=1 // pred_fallthru
      _
    // Predicated region
    $region10: #{ffn_forward.1} parent=1 // pred_check
      _
    $region11: #{ffn_forward.1} parent=1 // pred_check_branch
      %38 = sbr.rel (0) target = $region13
    $region12: #{ffn_forward.1} parent=1 // pred_region
      _
    $region13: #{ffn_forward.1} parent=1 // pred_fallthru
      _
    // Predicated region
    $region14: #{ffn_forward.1} parent=1 // pred_check
      _
    $region15: #{ffn_forward.1} parent=1 // pred_check_branch
      %40 = sbr.rel (0) target = $region17
    $region16: #{ffn_forward.1} parent=1 // pred_region
      %s42 = ssub.s32 8192, 8192
      %43 = vsyncadd [#allocation7], %s42
      %s44 = sshll.u32 [#allocation8], 4
      %s45 = int_to_ptr.vmem [resolvable:$true] %s44
      %50 = dma.hbm_to_vmem [thread:$0]  %s3, 8192, %s45, [#allocation7], 128, 128, 8
    $region17: #{ffn_forward.1} parent=1 // pred_fallthru
      _
    // Predicated region
    $region18: #{ffn_forward.1} parent=1 // pred_check
      _
    $region19: #{ffn_forward.1} parent=1 // pred_check_branch
      %52 = sbr.rel (0) target = $region21
    $region20: #{ffn_forward.1} parent=1 // pred_region
      _
    $region21: #{ffn_forward.1} parent=1 // pred_fallthru
      _
    // Predicated region
    $region22: #{ffn_forward.1} parent=1 // pred_check
      _
    $region23: #{ffn_forward.1} parent=1 // pred_check_branch
      %54 = sbr.rel (0) target = $region25
    $region24: #{ffn_forward.1} parent=1 // pred_region
      %55 = dma.done [#allocation4], 256
    $region25: #{ffn_forward.1} parent=1 // pred_fallthru
      _
    // Predicated region
    $region26: #{ffn_forward.1} parent=1 // pred_check
      _
    $region27: #{ffn_forward.1} parent=1 // pred_check_branch
      %57 = sbr.rel (0) target = $region29
    $region28: #{ffn_forward.1} parent=1 // pred_region
      %58 = dma.done [#allocation7], 8192
    $region29: #{ffn_forward.1} parent=1 // pred_fallthru
      _
    // Predicated region
    $region30: #{ffn_forward.1} parent=1 // pred_check
      _
    $region31: #{ffn_forward.1} parent=1 // pred_check_branch
      %60 = sbr.rel (0) target = $region33
    $region32: #{ffn_forward.1} parent=1 // pred_region
      %61 = dma.done [#allocation7], 8192
    $region33: #{ffn_forward.1} parent=1 // pred_fallthru
      _
    %p62 = scmp.eq.s32.totalorder 0, 0
    // Predicated region
    $region34: #{ffn_forward.1} parent=1 // pred_check
      %p63 = pneg %p62
    $region35: #{ffn_forward.1} parent=1 // pred_check_branch
      %65 = sbr.rel (%p63) target = $region37
    $region36: #{ffn_forward.1} parent=1 // pred_region
      %v66 = vld [vmem:[%s4] sm:$0x1]
      %v68 = vlaneseq
      %v69 = vshrl.u32 %v68, 7
      %v70 = vsub.s32 0, %v69
      %v71 = vrot.slane %v66, %v70
      %73 = vst [vmem:[#allocation2] sm:$0xff] %v71
      %74 = vst [vmem:[#allocation2 + $0x8] sm:$0xff] %v71
    $region37: #{ffn_forward.1} parent=1 // pred_fallthru
      _
    %v75 = vld [vmem:[#allocation3] sm:$0xff]
    %v76 = vld [vmem:[#allocation3 + $0x8] sm:$0xff]
    %v77 = vld [vmem:[#allocation6] sm:$0xff]
    %v78 = vld [vmem:[#allocation6 + $0x8] sm:$0xff]
    %v79 = vld [vmem:[#allocation6 + $0x10] sm:$0xff]
    %v80 = vld [vmem:[#allocation6 + $0x18] sm:$0xff]
    %v81 = vld [vmem:[#allocation6 + $0x20] sm:$0xff]
    %v82 = vld [vmem:[#allocation6 + $0x28] sm:$0xff]
    %v83 = vld [vmem:[#allocation6 + $0x30] sm:$0xff]
    %v84 = vld [vmem:[#allocation6 + $0x38] sm:$0xff]
    %v85 = vld [vmem:[#allocation6 + $0x40] sm:$0xff]
    %v86 = vld [vmem:[#allocation6 + $0x48] sm:$0xff]
    %v87 = vld [vmem:[#allocation6 + $0x50] sm:$0xff]
    %v88 = vld [vmem:[#allocation6 + $0x58] sm:$0xff]
    %v89 = vld [vmem:[#allocation6 + $0x60] sm:$0xff]
    %v90 = vld [vmem:[#allocation6 + $0x68] sm:$0xff]
    %v91 = vld [vmem:[#allocation6 + $0x70] sm:$0xff]
    %v92 = vld [vmem:[#allocation6 + $0x78] sm:$0xff]
    %v93 = vld [vmem:[#allocation6 + $0x80] sm:$0xff]
    %v94 = vld [vmem:[#allocation6 + $0x88] sm:$0xff]
    %v95 = vld [vmem:[#allocation6 + $0x90] sm:$0xff]
    %v96 = vld [vmem:[#allocation6 + $0x98] sm:$0xff]
    %v97 = vld [vmem:[#allocation6 + $0xa0] sm:$0xff]
    %v98 = vld [vmem:[#allocation6 + $0xa8] sm:$0xff]
    %v99 = vld [vmem:[#allocation6 + $0xb0] sm:$0xff]
    %v100 = vld [vmem:[#allocation6 + $0xb8] sm:$0xff]
    %v101 = vld [vmem:[#allocation6 + $0xc0] sm:$0xff]
    %v102 = vld [vmem:[#allocation6 + $0xc8] sm:$0xff]
    %v103 = vld [vmem:[#allocation6 + $0xd0] sm:$0xff]
    %v104 = vld [vmem:[#allocation6 + $0xd8] sm:$0xff]
    %v105 = vld [vmem:[#allocation6 + $0xe0] sm:$0xff]
    %v106 = vld [vmem:[#allocation6 + $0xe8] sm:$0xff]
    %v107 = vld [vmem:[#allocation6 + $0xf0] sm:$0xff]
    %v108 = vld [vmem:[#allocation6 + $0xf8] sm:$0xff]
    %v109 = vld [vmem:[#allocation6 + $0x100] sm:$0xff]
    %v110 = vld [vmem:[#allocation6 + $0x108] sm:$0xff]
    %v111 = vld [vmem:[#allocation6 + $0x110] sm:$0xff]
    %v112 = vld [vmem:[#allocation6 + $0x118] sm:$0xff]
    %v113 = vld [vmem:[#allocation6 + $0x120] sm:$0xff]
    %v114 = vld [vmem:[#allocation6 + $0x128] sm:$0xff]
    %v115 = vld [vmem:[#allocation6 + $0x130] sm:$0xff]
    %v116 = vld [vmem:[#allocation6 + $0x138] sm:$0xff]
    %v117 = vld [vmem:[#allocation6 + $0x140] sm:$0xff]
    %v118 = vld [vmem:[#allocation6 + $0x148] sm:$0xff]
    %v119 = vld [vmem:[#allocation6 + $0x150] sm:$0xff]
    %v120 = vld [vmem:[#allocation6 + $0x158] sm:$0xff]
    %v121 = vld [vmem:[#allocation6 + $0x160] sm:$0xff]
    %v122 = vld [vmem:[#allocation6 + $0x168] sm:$0xff]
    %v123 = vld [vmem:[#allocation6 + $0x170] sm:$0xff]
    %v124 = vld [vmem:[#allocation6 + $0x178] sm:$0xff]
    %v125 = vld [vmem:[#allocation6 + $0x180] sm:$0xff]
    %v126 = vld [vmem:[#allocation6 + $0x188] sm:$0xff]
    %v127 = vld [vmem:[#allocation6 + $0x190] sm:$0xff]
    %v128 = vld [vmem:[#allocation6 + $0x198] sm:$0xff]
    %v129 = vld [vmem:[#allocation6 + $0x1a0] sm:$0xff]
    %v130 = vld [vmem:[#allocation6 + $0x1a8] sm:$0xff]
    %v131 = vld [vmem:[#allocation6 + $0x1b0] sm:$0xff]
    %v132 = vld [vmem:[#allocation6 + $0x1b8] sm:$0xff]
    %v133 = vld [vmem:[#allocation6 + $0x1c0] sm:$0xff]
    %v134 = vld [vmem:[#allocation6 + $0x1c8] sm:$0xff]
    %v135 = vld [vmem:[#allocation6 + $0x1d0] sm:$0xff]
    %v136 = vld [vmem:[#allocation6 + $0x1d8] sm:$0xff]
    %v137 = vld [vmem:[#allocation6 + $0x1e0] sm:$0xff]
    %v138 = vld [vmem:[#allocation6 + $0x1e8] sm:$0xff]
    %v139 = vld [vmem:[#allocation6 + $0x1f0] sm:$0xff]
    %v140 = vld [vmem:[#allocation6 + $0x1f8] sm:$0xff]
    %v141 = vld [vmem:[%s2] sm:$0xf]
    %v143 = vlaneseq
    %v144 = vshrl.u32 %v143, 7
    %v145 = vsub.s32 0, %v144
    %v146 = vrot.slane %v141, %v145
    %v147 = vlaneseq
    %v148 = vshrl.u32 %v147, 7
    %v149 = vsub.s32 1, %v148
    %v150 = vrot.slane %v141, %v149
    %v151 = vlaneseq
    %v152 = vshrl.u32 %v151, 7
    %v153 = vsub.s32 2, %v152
    %v154 = vrot.slane %v141, %v153
    %v155 = vlaneseq
    %v156 = vshrl.u32 %v155, 7
    %v157 = vsub.s32 3, %v156
    %v158 = vrot.slane %v141, %v157
    %163 = vmatprep.subr.mxu0 %v78
    %164 = vmatpush1.msra.mxu0 %v77
    %165 = vmatprep.subr.mxu0 %v82
    %166 = vmatpush1.msra.mxu0 %v81
    %167 = vmatprep.subr.mxu0 %v86
    %168 = vmatpush1.msra.mxu0 %v85
    %169 = vmatprep.subr.mxu0 %v90
    %170 = vmatpush1.msra.mxu0 %v89
    %171 = vmatprep.subr.mxu0 %v94
    %172 = vmatpush1.msra.mxu0 %v93
    %173 = vmatprep.subr.mxu0 %v98
    %174 = vmatpush1.msra.mxu0 %v97
    %175 = vmatprep.subr.mxu0 %v102
    %176 = vmatpush1.msra.mxu0 %v101
    %177 = vmatprep.subr.mxu0 %v106
    %178 = vmatpush1.msra.mxu0 %v105
    %179 = vmatprep.subr.mxu0 %v110
    %180 = vmatpush1.msra.mxu0 %v109
    %181 = vmatprep.subr.mxu0 %v114
    %182 = vmatpush1.msra.mxu0 %v113
    %183 = vmatprep.subr.mxu0 %v118
    %184 = vmatpush1.msra.mxu0 %v117
    %185 = vmatprep.subr.mxu0 %v122
    %186 = vmatpush1.msra.mxu0 %v121
    %187 = vmatprep.subr.mxu0 %v126
    %188 = vmatpush1.msra.mxu0 %v125
    %189 = vmatprep.subr.mxu0 %v130
    %190 = vmatpush1.msra.mxu0 %v129
    %191 = vmatprep.subr.mxu0 %v134
    %192 = vmatpush1.msra.mxu0 %v133
    %193 = vmatprep.subr.mxu0 %v138
    %194 = vmatpush1.msra.mxu0 %v137
    %195 = vmatprep.subr.mxu0 0.0
    %196 = vmatpush1.msra.mxu0 0.0
    %197 = vmatprep.subr.mxu0 0.0
    %198 = vmatpush1.msra.mxu0 0.0
    %199 = vmatprep.subr.mxu0 0.0
    %200 = vmatpush1.msra.mxu0 0.0
    %201 = vmatprep.subr.mxu0 0.0
    %202 = vmatpush1.msra.mxu0 0.0
    %203 = vmatprep.subr.mxu0 0.0
    %204 = vmatpush1.msra.mxu0 0.0
    %205 = vmatprep.subr.mxu0 0.0
    %206 = vmatpush1.msra.mxu0 0.0
    %207 = vmatprep.subr.mxu0 0.0
    %208 = vmatpush1.msra.mxu0 0.0
    %209 = vmatprep.subr.mxu0 0.0
    %210 = vmatpush1.msra.mxu0 0.0
    %211 = vmatprep.subr.mxu0 0.0
    %212 = vmatpush1.msra.mxu0 0.0
    %213 = vmatprep.subr.mxu0 0.0
    %214 = vmatpush1.msra.mxu0 0.0
    %215 = vmatprep.subr.mxu0 0.0
    %216 = vmatpush1.msra.mxu0 0.0
    %217 = vmatprep.subr.mxu0 0.0
    %218 = vmatpush1.msra.mxu0 0.0
    %219 = vmatprep.subr.mxu0 0.0
    %220 = vmatpush1.msra.mxu0 0.0
    %221 = vmatprep.subr.mxu0 0.0
    %222 = vmatpush1.msra.mxu0 0.0
    %223 = vmatprep.subr.mxu0 0.0
    %224 = vmatpush1.msra.mxu0 0.0
    %225 = vmatprep.subr.mxu0 0.0
    %226 = vmatpush1.msra.mxu0 0.0
    %227 = vmatprep.mubr.f32.mxu0 0.0
    %228 = vmatmul.mubr.f32.gmra.mrb[0].mxu0 %v75
    %v229 = vpop.f32.mrb[0].mxu0
    %v230 = vadd.f32 %v146, %v229
    %v231 = vpop.f32.mrb[0].mxu0
    %v232 = vadd.f32 %v150, %v231
    %233 = vmatprep.mubr.f32.mxu0 0.0
    %234 = vmatmul.mubr.f32.gmra.mrb[0].mxu0 %v76
    %v235 = vpop.f32.mrb[0].mxu0
    %v236 = vadd.f32 %v146, %v235
    %v237 = vpop.f32.mrb[0].mxu0
    %v238 = vadd.f32 %v150, %v237
    %239 = vdwg.mxu0
    %240 = vmatprep.subr.mxu0 %v80
    %241 = vmatpush1.msra.mxu0 %v79
    %242 = vmatprep.subr.mxu0 %v84
    %243 = vmatpush1.msra.mxu0 %v83
    %244 = vmatprep.subr.mxu0 %v88
    %245 = vmatpush1.msra.mxu0 %v87
    %246 = vmatprep.subr.mxu0 %v92
    %247 = vmatpush1.msra.mxu0 %v91
    %248 = vmatprep.subr.mxu0 %v96
    %249 = vmatpush1.msra.mxu0 %v95
    %250 = vmatprep.subr.mxu0 %v100
    %251 = vmatpush1.msra.mxu0 %v99
    %252 = vmatprep.subr.mxu0 %v104
    %253 = vmatpush1.msra.mxu0 %v103
    %254 = vmatprep.subr.mxu0 %v108
    %255 = vmatpush1.msra.mxu0 %v107
    %256 = vmatprep.subr.mxu0 %v112
    %257 = vmatpush1.msra.mxu0 %v111
    %258 = vmatprep.subr.mxu0 %v116
    %259 = vmatpush1.msra.mxu0 %v115
    %260 = vmatprep.subr.mxu0 %v120
    %261 = vmatpush1.msra.mxu0 %v119
    %262 = vmatprep.subr.mxu0 %v124
    %263 = vmatpush1.msra.mxu0 %v123
    %264 = vmatprep.subr.mxu0 %v128
    %265 = vmatpush1.msra.mxu0 %v127
    %266 = vmatprep.subr.mxu0 %v132
    %267 = vmatpush1.msra.mxu0 %v131
    %268 = vmatprep.subr.mxu0 %v136
    %269 = vmatpush1.msra.mxu0 %v135
    %270 = vmatprep.subr.mxu0 %v140
    %271 = vmatpush1.msra.mxu0 %v139
    %272 = vmatprep.subr.mxu0 0.0
    %273 = vmatpush1.msra.mxu0 0.0
    %274 = vmatprep.subr.mxu0 0.0
    %275 = vmatpush1.msra.mxu0 0.0
    %276 = vmatprep.subr.mxu0 0.0
    %277 = vmatpush1.msra.mxu0 0.0
    %278 = vmatprep.subr.mxu0 0.0
    %279 = vmatpush1.msra.mxu0 0.0
    %280 = vmatprep.subr.mxu0 0.0
    %281 = vmatpush1.msra.mxu0 0.0
    %282 = vmatprep.subr.mxu0 0.0
    %283 = vmatpush1.msra.mxu0 0.0
    %284 = vmatprep.subr.mxu0 0.0
    %285 = vmatpush1.msra.mxu0 0.0
    %286 = vmatprep.subr.mxu0 0.0
    %287 = vmatpush1.msra.mxu0 0.0
    %288 = vmatprep.subr.mxu0 0.0
    %289 = vmatpush1.msra.mxu0 0.0
    %290 = vmatprep.subr.mxu0 0.0
    %291 = vmatpush1.msra.mxu0 0.0
    %292 = vmatprep.subr.mxu0 0.0
    %293 = vmatpush1.msra.mxu0 0.0
    %294 = vmatprep.subr.mxu0 0.0
    %295 = vmatpush1.msra.mxu0 0.0
    %296 = vmatprep.subr.mxu0 0.0
    %297 = vmatpush1.msra.mxu0 0.0
    %298 = vmatprep.subr.mxu0 0.0
    %299 = vmatpush1.msra.mxu0 0.0
    %300 = vmatprep.subr.mxu0 0.0
    %301 = vmatpush1.msra.mxu0 0.0
    %302 = vmatprep.subr.mxu0 0.0
    %303 = vmatpush1.msra.mxu0 0.0
    %304 = vmatprep.mubr.f32.mxu0 0.0
    %305 = vmatmul.mubr.f32.gmra.mrb[0].mxu0 %v75
    %v306 = vpop.f32.mrb[0].mxu0
    %v307 = vadd.f32 %v154, %v306
    %v308 = vpop.f32.mrb[0].mxu0
    %v309 = vadd.f32 %v158, %v308
    %310 = vmatprep.mubr.f32.mxu0 0.0
    %311 = vmatmul.mubr.f32.gmra.mrb[0].mxu0 %v76
    %v312 = vpop.f32.mrb[0].mxu0
    %v313 = vadd.f32 %v154, %v312
    %v314 = vpop.f32.mrb[0].mxu0
    %v315 = vadd.f32 %v158, %v314
    %316 = vdwg.mxu0
    %v317 = vmul.f32 %v230, 0.5
    %v318 = vmul.f32 %v232, 0.5
    %v319 = vmul.f32 %v307, 0.5
    %v320 = vmul.f32 %v309, 0.5
    %v321 = vmul.f32 %v236, 0.5
    %v322 = vmul.f32 %v238, 0.5
    %v323 = vmul.f32 %v313, 0.5
    %v324 = vmul.f32 %v315, 0.5
    %v325 = vmul.f32 %v230, 0.70710677
    %v326 = vmul.f32 %v232, 0.70710677
    %v327 = vmul.f32 %v307, 0.70710677
    %v328 = vmul.f32 %v309, 0.70710677
    %v329 = vmul.f32 %v236, 0.70710677
    %v330 = vmul.f32 %v238, 0.70710677
    %v331 = vmul.f32 %v313, 0.70710677
    %v332 = vmul.f32 %v315, 0.70710677
    %v333 = verf.f32.pop %v325
    %v334 = verf.f32.pop %v326
    %v335 = verf.f32.pop %v327
    %v336 = verf.f32.pop %v328
    %v337 = verf.f32.pop %v329
    %v338 = verf.f32.pop %v330
    %v339 = verf.f32.pop %v331
    %v340 = verf.f32.pop %v332
    %v341 = vadd.f32 %v333, 1.0
    %v342 = vadd.f32 %v334, 1.0
    %v343 = vadd.f32 %v335, 1.0
    %v344 = vadd.f32 %v336, 1.0
    %v345 = vadd.f32 %v337, 1.0
    %v346 = vadd.f32 %v338, 1.0
    %v347 = vadd.f32 %v339, 1.0
    %v348 = vadd.f32 %v340, 1.0
    %v349 = vmul.f32 %v317, %v341
    %v350 = vmul.f32 %v318, %v342
    %v351 = vmul.f32 %v319, %v343
    %v352 = vmul.f32 %v320, %v344
    %v353 = vmul.f32 %v321, %v345
    %v354 = vmul.f32 %v322, %v346
    %v355 = vmul.f32 %v323, %v347
    %v356 = vmul.f32 %v324, %v348
    %v357 = vld [vmem:[#allocation2] sm:$0xff]
    %v358 = vld [vmem:[#allocation2 + $0x8] sm:$0xff]
    %v359 = vld [vmem:[#allocation8] sm:$0xff]
    %v360 = vld [vmem:[#allocation8 + $0x8] sm:$0xff]
    %v361 = vld [vmem:[#allocation8 + $0x10] sm:$0xff]
    %v362 = vld [vmem:[#allocation8 + $0x18] sm:$0xff]
    %v363 = vld [vmem:[#allocation8 + $0x20] sm:$0xff]
    %v364 = vld [vmem:[#allocation8 + $0x28] sm:$0xff]
    %v365 = vld [vmem:[#allocation8 + $0x30] sm:$0xff]
    %v366 = vld [vmem:[#allocation8 + $0x38] sm:$0xff]
    %v367 = vld [vmem:[#allocation8 + $0x40] sm:$0xff]
    %v368 = vld [vmem:[#allocation8 + $0x48] sm:$0xff]
    %v369 = vld [vmem:[#allocation8 + $0x50] sm:$0xff]
    %v370 = vld [vmem:[#allocation8 + $0x58] sm:$0xff]
    %v371 = vld [vmem:[#allocation8 + $0x60] sm:$0xff]
    %v372 = vld [vmem:[#allocation8 + $0x68] sm:$0xff]
    %v373 = vld [vmem:[#allocation8 + $0x70] sm:$0xff]
    %v374 = vld [vmem:[#allocation8 + $0x78] sm:$0xff]
    %v375 = vld [vmem:[#allocation8 + $0x80] sm:$0xff]
    %v376 = vld [vmem:[#allocation8 + $0x88] sm:$0xff]
    %v377 = vld [vmem:[#allocation8 + $0x90] sm:$0xff]
    %v378 = vld [vmem:[#allocation8 + $0x98] sm:$0xff]
    %v379 = vld [vmem:[#allocation8 + $0xa0] sm:$0xff]
    %v380 = vld [vmem:[#allocation8 + $0xa8] sm:$0xff]
    %v381 = vld [vmem:[#allocation8 + $0xb0] sm:$0xff]
    %v382 = vld [vmem:[#allocation8 + $0xb8] sm:$0xff]
    %v383 = vld [vmem:[#allocation8 + $0xc0] sm:$0xff]
    %v384 = vld [vmem:[#allocation8 + $0xc8] sm:$0xff]
    %v385 = vld [vmem:[#allocation8 + $0xd0] sm:$0xff]
    %v386 = vld [vmem:[#allocation8 + $0xd8] sm:$0xff]
    %v387 = vld [vmem:[#allocation8 + $0xe0] sm:$0xff]
    %v388 = vld [vmem:[#allocation8 + $0xe8] sm:$0xff]
    %v389 = vld [vmem:[#allocation8 + $0xf0] sm:$0xff]
    %v390 = vld [vmem:[#allocation8 + $0xf8] sm:$0xff]
    %v391 = vld [vmem:[#allocation8 + $0x100] sm:$0xff]
    %v392 = vld [vmem:[#allocation8 + $0x108] sm:$0xff]
    %v393 = vld [vmem:[#allocation8 + $0x110] sm:$0xff]
    %v394 = vld [vmem:[#allocation8 + $0x118] sm:$0xff]
    %v395 = vld [vmem:[#allocation8 + $0x120] sm:$0xff]
    %v396 = vld [vmem:[#allocation8 + $0x128] sm:$0xff]
    %v397 = vld [vmem:[#allocation8 + $0x130] sm:$0xff]
    %v398 = vld [vmem:[#allocation8 + $0x138] sm:$0xff]
    %v399 = vld [vmem:[#allocation8 + $0x140] sm:$0xff]
    %v400 = vld [vmem:[#allocation8 + $0x148] sm:$0xff]
    %v401 = vld [vmem:[#allocation8 + $0x150] sm:$0xff]
    %v402 = vld [vmem:[#allocation8 + $0x158] sm:$0xff]
    %v403 = vld [vmem:[#allocation8 + $0x160] sm:$0xff]
    %v404 = vld [vmem:[#allocation8 + $0x168] sm:$0xff]
    %v405 = vld [vmem:[#allocation8 + $0x170] sm:$0xff]
    %v406 = vld [vmem:[#allocation8 + $0x178] sm:$0xff]
    %v407 = vld [vmem:[#allocation8 + $0x180] sm:$0xff]
    %v408 = vld [vmem:[#allocation8 + $0x188] sm:$0xff]
    %v409 = vld [vmem:[#allocation8 + $0x190] sm:$0xff]
    %v410 = vld [vmem:[#allocation8 + $0x198] sm:$0xff]
    %v411 = vld [vmem:[#allocation8 + $0x1a0] sm:$0xff]
    %v412 = vld [vmem:[#allocation8 + $0x1a8] sm:$0xff]
    %v413 = vld [vmem:[#allocation8 + $0x1b0] sm:$0xff]
    %v414 = vld [vmem:[#allocation8 + $0x1b8] sm:$0xff]
    %v415 = vld [vmem:[#allocation8 + $0x1c0] sm:$0xff]
    %v416 = vld [vmem:[#allocation8 + $0x1c8] sm:$0xff]
    %v417 = vld [vmem:[#allocation8 + $0x1d0] sm:$0xff]
    %v418 = vld [vmem:[#allocation8 + $0x1d8] sm:$0xff]
    %v419 = vld [vmem:[#allocation8 + $0x1e0] sm:$0xff]
    %v420 = vld [vmem:[#allocation8 + $0x1e8] sm:$0xff]
    %v421 = vld [vmem:[#allocation8 + $0x1f0] sm:$0xff]
    %v422 = vld [vmem:[#allocation8 + $0x1f8] sm:$0xff]
    %423 = vmatprep.subr.mxu0 0.0
    %424 = vmatpush1.msra.mxu0 %v359
    %425 = vmatprep.subr.mxu0 0.0
    %426 = vmatpush1.msra.mxu0 %v360
    %427 = vmatprep.subr.mxu0 0.0
    %428 = vmatpush1.msra.mxu0 %v361
    %429 = vmatprep.subr.mxu0 0.0
    %430 = vmatpush1.msra.mxu0 %v362
    %431 = vmatprep.subr.mxu0 0.0
    %432 = vmatpush1.msra.mxu0 %v363
    %433 = vmatprep.subr.mxu0 0.0
    %434 = vmatpush1.msra.mxu0 %v364
    %435 = vmatprep.subr.mxu0 0.0
    %436 = vmatpush1.msra.mxu0 %v365
    %437 = vmatprep.subr.mxu0 0.0
    %438 = vmatpush1.msra.mxu0 %v366
    %439 = vmatprep.subr.mxu0 0.0
    %440 = vmatpush1.msra.mxu0 %v367
    %441 = vmatprep.subr.mxu0 0.0
    %442 = vmatpush1.msra.mxu0 %v368
    %443 = vmatprep.subr.mxu0 0.0
    %444 = vmatpush1.msra.mxu0 %v369
    %445 = vmatprep.subr.mxu0 0.0
    %446 = vmatpush1.msra.mxu0 %v370
    %447 = vmatprep.subr.mxu0 0.0
    %448 = vmatpush1.msra.mxu0 %v371
    %449 = vmatprep.subr.mxu0 0.0
    %450 = vmatpush1.msra.mxu0 %v372
    %451 = vmatprep.subr.mxu0 0.0
    %452 = vmatpush1.msra.mxu0 %v373
    %453 = vmatprep.subr.mxu0 0.0
    %454 = vmatpush1.msra.mxu0 %v374
    %455 = vmatprep.subr.mxu0 0.0
    %456 = vmatpush1.msra.mxu0 %v375
    %457 = vmatprep.subr.mxu0 0.0
    %458 = vmatpush1.msra.mxu0 %v376
    %459 = vmatprep.subr.mxu0 0.0
    %460 = vmatpush1.msra.mxu0 %v377
    %461 = vmatprep.subr.mxu0 0.0
    %462 = vmatpush1.msra.mxu0 %v378
    %463 = vmatprep.subr.mxu0 0.0
    %464 = vmatpush1.msra.mxu0 %v379
    %465 = vmatprep.subr.mxu0 0.0
    %466 = vmatpush1.msra.mxu0 %v380
    %467 = vmatprep.subr.mxu0 0.0
    %468 = vmatpush1.msra.mxu0 %v381
    %469 = vmatprep.subr.mxu0 0.0
    %470 = vmatpush1.msra.mxu0 %v382
    %471 = vmatprep.subr.mxu0 0.0
    %472 = vmatpush1.msra.mxu0 %v383
    %473 = vmatprep.subr.mxu0 0.0
    %474 = vmatpush1.msra.mxu0 %v384
    %475 = vmatprep.subr.mxu0 0.0
    %476 = vmatpush1.msra.mxu0 %v385
    %477 = vmatprep.subr.mxu0 0.0
    %478 = vmatpush1.msra.mxu0 %v386
    %479 = vmatprep.subr.mxu0 0.0
    %480 = vmatpush1.msra.mxu0 %v387
    %481 = vmatprep.subr.mxu0 0.0
    %482 = vmatpush1.msra.mxu0 %v388
    %483 = vmatprep.subr.mxu0 0.0
    %484 = vmatpush1.msra.mxu0 %v389
    %485 = vmatprep.subr.mxu0 0.0
    %486 = vmatpush1.msra.mxu0 %v390
    %487 = vmatprep.mubr.f32.mxu0 %v350
    %488 = vmatmul.mubr.f32.gmra.mrb[0].mxu0 %v349
    %v489 = vpop.f32.mrb[0].mxu0
    %v490 = vadd.f32 0.0, %v489
    %v491 = vpop.f32.mrb[0].mxu0
    %492 = vmatprep.mubr.f32.mxu0 %v354
    %493 = vmatmul.mubr.f32.gmra.mrb[0].mxu0 %v353
    %v494 = vpop.f32.mrb[0].mxu0
    %v495 = vadd.f32 0.0, %v494
    %v496 = vpop.f32.mrb[0].mxu0
    %497 = vdwg.mxu0
    %498 = vmatprep.subr.mxu0 0.0
    %499 = vmatpush1.msra.mxu0 %v391
    %500 = vmatprep.subr.mxu0 0.0
    %501 = vmatpush1.msra.mxu0 %v392
    %502 = vmatprep.subr.mxu0 0.0
    %503 = vmatpush1.msra.mxu0 %v393
    %504 = vmatprep.subr.mxu0 0.0
    %505 = vmatpush1.msra.mxu0 %v394
    %506 = vmatprep.subr.mxu0 0.0
    %507 = vmatpush1.msra.mxu0 %v395
    %508 = vmatprep.subr.mxu0 0.0
    %509 = vmatpush1.msra.mxu0 %v396
    %510 = vmatprep.subr.mxu0 0.0
    %511 = vmatpush1.msra.mxu0 %v397
    %512 = vmatprep.subr.mxu0 0.0
    %513 = vmatpush1.msra.mxu0 %v398
    %514 = vmatprep.subr.mxu0 0.0
    %515 = vmatpush1.msra.mxu0 %v399
    %516 = vmatprep.subr.mxu0 0.0
    %517 = vmatpush1.msra.mxu0 %v400
    %518 = vmatprep.subr.mxu0 0.0
    %519 = vmatpush1.msra.mxu0 %v401
    %520 = vmatprep.subr.mxu0 0.0
    %521 = vmatpush1.msra.mxu0 %v402
    %522 = vmatprep.subr.mxu0 0.0
    %523 = vmatpush1.msra.mxu0 %v403
    %524 = vmatprep.subr.mxu0 0.0
    %525 = vmatpush1.msra.mxu0 %v404
    %526 = vmatprep.subr.mxu0 0.0
    %527 = vmatpush1.msra.mxu0 %v405
    %528 = vmatprep.subr.mxu0 0.0
    %529 = vmatpush1.msra.mxu0 %v406
    %530 = vmatprep.subr.mxu0 0.0
    %531 = vmatpush1.msra.mxu0 %v407
    %532 = vmatprep.subr.mxu0 0.0
    %533 = vmatpush1.msra.mxu0 %v408
    %534 = vmatprep.subr.mxu0 0.0
    %535 = vmatpush1.msra.mxu0 %v409
    %536 = vmatprep.subr.mxu0 0.0
    %537 = vmatpush1.msra.mxu0 %v410
    %538 = vmatprep.subr.mxu0 0.0
    %539 = vmatpush1.msra.mxu0 %v411
    %540 = vmatprep.subr.mxu0 0.0
    %541 = vmatpush1.msra.mxu0 %v412
    %542 = vmatprep.subr.mxu0 0.0
    %543 = vmatpush1.msra.mxu0 %v413
    %544 = vmatprep.subr.mxu0 0.0
    %545 = vmatpush1.msra.mxu0 %v414
    %546 = vmatprep.subr.mxu0 0.0
    %547 = vmatpush1.msra.mxu0 %v415
    %548 = vmatprep.subr.mxu0 0.0
    %549 = vmatpush1.msra.mxu0 %v416
    %550 = vmatprep.subr.mxu0 0.0
    %551 = vmatpush1.msra.mxu0 %v417
    %552 = vmatprep.subr.mxu0 0.0
    %553 = vmatpush1.msra.mxu0 %v418
    %554 = vmatprep.subr.mxu0 0.0
    %555 = vmatpush1.msra.mxu0 %v419
    %556 = vmatprep.subr.mxu0 0.0
    %557 = vmatpush1.msra.mxu0 %v420
    %558 = vmatprep.subr.mxu0 0.0
    %559 = vmatpush1.msra.mxu0 %v421
    %560 = vmatprep.subr.mxu0 0.0
    %561 = vmatpush1.msra.mxu0 %v422
    %562 = vmatprep.mubr.f32.mxu0 %v352
    %563 = vmatmul.mubr.f32.gmra.mrb[0].mxu0 %v351
    %v564 = vpop.f32.mrb[0].mxu0
    %v565 = vadd.f32 %v490, %v564
    %v566 = vpop.f32.mrb[0].mxu0
    %567 = vmatprep.mubr.f32.mxu0 %v356
    %568 = vmatmul.mubr.f32.gmra.mrb[0].mxu0 %v355
    %v569 = vpop.f32.mrb[0].mxu0
    %v570 = vadd.f32 %v495, %v569
    %v571 = vpop.f32.mrb[0].mxu0
    %572 = vdwg.mxu0
    %v573 = vadd.f32 %v357, %v565
    %v574 = vadd.f32 %v358, %v570
    %575 = vst [vmem:[#allocation2] sm:$0xff] %v573
    %576 = vst [vmem:[#allocation2 + $0x8] sm:$0xff] %v574
    // Predicated region
    $region38: #{ffn_forward.1} parent=1 // pred_check
      %p577 = pneg %p62
    $region39: #{ffn_forward.1} parent=1 // pred_check_branch
      %579 = sbr.rel (%p577) target = $region41
    $region40: #{ffn_forward.1} parent=1 // pred_region
      %v580 = vld [vmem:[#allocation2] sm:$0xff]
      %v581 = vld [vmem:[#allocation2 + $0x8] sm:$0xff]
      %582 = vst [vmem:[#allocation9] sm:$0xff] %v580
      %583 = vst [vmem:[#allocation9 + $0x8] sm:$0xff] %v581
    $region41: #{ffn_forward.1} parent=1 // pred_fallthru
      _
    // Predicated region
    $region42: #{ffn_forward.1} parent=1 // pred_check
      _
    $region43: #{ffn_forward.1} parent=1 // pred_check_branch
      %585 = sbr.rel (0) target = $region45
    $region44: #{ffn_forward.1} parent=1 // pred_region
      %s587 = ssub.s32 256, 256
      %588 = vsyncadd [#allocation5], %s587
      %s589 = sshll.u32 [#allocation9], 4
      %s590 = int_to_ptr.vmem [resolvable:$true] %s589
      %595 = dma.vmem_to_hbm [thread:$0]  %s590, 256, %s5, [#allocation5], 128, 128, 8
    $region45: #{ffn_forward.1} parent=1 // pred_fallthru
      _
    // Predicated region
    $region46: #{ffn_forward.1} parent=1 // pred_check
      _
    $region47: #{ffn_forward.1} parent=1 // pred_check_branch
      %597 = sbr.rel (0) target = $region49
    $region48: #{ffn_forward.1} parent=1 // pred_region
      %598 = dma.done [#allocation5], 256
    $region49: #{ffn_forward.1} parent=1 // pred_fallthru
      _
    %599 = vsyncpa [#allocation4], 1
    %600 = vsyncpa [#allocation7], 1
    %601 = vsyncpa [#allocation5], 1

</llo_original>
